<compile_context>
chip_gen: v6e
topology: v6e:2x2x1
jax: 0.10.0
libtpu: 0.0.40
codegen_flags: <defaults>
</compile_context>

<pallas_src>
import math

import jax
import jax.numpy as jnp
from jax.experimental import pallas as pl
from jax.experimental.pallas import tpu as pltpu


# ----------------------------------------------------------------------------
# Kernels
# ----------------------------------------------------------------------------

def _mm_bias_acc_kernel(x_ref, wt_ref, b_ref, o_ref, acc_ref):
    """3D grid (M, N, K): f32 accumulator, bias folded into k==0 init."""
    k = pl.program_id(2)

    @pl.when(k == 0)
    def _init():
        # Bias broadcast initializes the accumulator -> no epilogue VPU add
        # (helps v5e the most: f32-only VPU, single vst slot).
        acc_ref[...] = jnp.broadcast_to(b_ref[...], acc_ref.shape).astype(
            jnp.float32)

    acc_ref[...] += jnp.dot(
        x_ref[...], wt_ref[...], preferred_element_type=jnp.float32)

    @pl.when(k == pl.num_programs(2) - 1)
    def _finalize():
        o_ref[...] = acc_ref[...].astype(o_ref.dtype)


def _mm_acc_kernel(x_ref, wt_ref, o_ref, acc_ref):
    """3D grid (M, N, K): f32 accumulator, no bias."""
    k = pl.program_id(2)

    @pl.when(k == 0)
    def _init():
        acc_ref[...] = jnp.zeros_like(acc_ref)

    acc_ref[...] += jnp.dot(
        x_ref[...], wt_ref[...], preferred_element_type=jnp.float32)

    @pl.when(k == pl.num_programs(2) - 1)
    def _finalize():
        o_ref[...] = acc_ref[...].astype(o_ref.dtype)


def _mm_bias_kernel(x_ref, wt_ref, b_ref, o_ref):
    """2D grid (K collapsed into one tile): no scratch accumulator needed."""
    acc = jnp.dot(x_ref[...], wt_ref[...], preferred_element_type=jnp.float32)
    o_ref[...] = (acc + b_ref[...]).astype(o_ref.dtype)


def _mm_kernel(x_ref, wt_ref, o_ref):
    """2D grid (K collapsed), no bias."""
    o_ref[...] = jnp.dot(
        x_ref[...], wt_ref[...],
        preferred_element_type=jnp.float32).astype(o_ref.dtype)


# ----------------------------------------------------------------------------
# Tile selection / helpers
# ----------------------------------------------------------------------------

def _round_up(x, m):
    return (x + m - 1) // m * m


def _vmem_capacity_bytes():
    """Physical VMEM of the local chip; conservative 64 MiB (v7x) fallback."""
    try:
        info = pltpu.get_tpu_info()
        cap = getattr(info, "vmem_capacity_bytes", None)
        if cap:
            return int(cap)
    except Exception:
        pass
    return 64 * 1024 * 1024


def _sublane(compute_dtype):
    """Sublane packing: f32 -> 8, bf16 -> 16, 8-bit -> 32."""
    return {4: 8, 2: 16, 1: 32}.get(jnp.dtype(compute_dtype).itemsize, 8)


def _choose_tiles_nk(N, K, compute_dtype, block_n=None, block_k=None):
    """Pick (tn, tk); fat tiles, shrunk until the working set fits VMEM."""
    cd = jnp.dtype(compute_dtype).itemsize
    budget = _vmem_capacity_bytes() // 2      # leave room for internal scratch
    tn = block_n if block_n is not None else min(1024, _round_up(N, 128))
    tk = block_k if block_k is not None else min(2048, _round_up(K, 128))
    assert tn % 128 == 0 and tk % 128 == 0, "block_n/block_k must be x128"

    def ws(tn_, tk_, tm_=512):
        return (2 * tm_ * tk_ * cd            # x tile, double-buffered
                + 2 * tk_ * tn_ * cd          # W.T tile, double-buffered
                + 3 * tm_ * tn_ * 4)          # out (x2, <=f32) + f32 acc

    while block_k is None and ws(tn, tk) > budget and tk > 256:
        tk = max(256, _round_up(tk // 2, 128))
    while block_n is None and ws(tn, tk) > budget and tn > 256:
        tn = max(256, _round_up(tn // 2, 128))
    return tn, tk


def _choose_tile_m(M, compute_dtype):
    return min(512, _round_up(M, _sublane(compute_dtype)))


# ----------------------------------------------------------------------------
# Weight-stationary preparation + forward
# ----------------------------------------------------------------------------

def us_linear_prepare(weight, bias=None, compute_dtype=jnp.bfloat16,
                      block_n=None, block_k=None):
    """One-time prep: weight -> (K, N) in compute_dtype, padded to tile grid.

    Cache the returned dict across forward calls (weight-stationary); this
    removes the per-call transpose + pad + cast of the weight.
    """
    N, K = weight.shape
    cd = jnp.dtype(compute_dtype)
    tn, tk = _choose_tiles_nk(N, K, cd, block_n, block_k)
    Np, Kp = _round_up(N, tn), _round_up(K, tk)

    wt = weight.T.astype(cd)
    if (Kp, Np) != (K, N):
        wt = jnp.pad(wt, ((0, Kp - K), (0, Np - N)))

    if bias is not None:
        b = bias.astype(jnp.float32).reshape(1, N)
        if Np != N:
            b = jnp.pad(b, ((0, 0), (0, Np - N)))
    else:
        b = None

    return {"wt": wt, "bias": b, "n": N, "k": K, "tn": tn, "tk": tk,
            "compute_dtype": cd}


def us_linear_apply(x, prepared, block_m=None):
    """y = x @ W.T + b using a prepared (transposed/padded/cast) weight."""
    B, K = x.shape
    assert K == prepared["k"], "input feature dim mismatch"
    N = prepared["n"]
    cd = prepared["compute_dtype"]
    out_dtype = x.dtype
    tn, tk = prepared["tn"], prepared["tk"]
    wt_p, b_p = prepared["wt"], prepared["bias"]
    Kp, Np = wt_p.shape

    if block_m is None:
        tm = _choose_tile_m(B, cd)
    else:
        assert block_m % 8 == 0, "block_m must be a multiple of 8"
        tm = block_m
    Mp = _round_up(B, tm)

    # v7x megacore: if the whole problem collapsed to one output tile, split N
    # so both TensorCores get work (harmless on single-TC v5e/v6e).
    if Mp // tm == 1 and Np // tn == 1 and tn >= 256 and (tn // 2) % 128 == 0:
        tn //= 2

    x_c = x.astype(cd)
    if (Mp, Kp) != (B, K):
        x_c = jnp.pad(x_c, ((0, Mp - B), (0, Kp - K)))

    grid_m, grid_n, grid_k = Mp // tm, Np // tn, Kp // tk

    cdb = jnp.dtype(cd).itemsize
    odb = jnp.dtype(out_dtype).itemsize
    ws = (2 * tm * tk * cdb + 2 * tk * tn * cdb + 2 * tm * tn * odb
          + (tm * tn * 4 if grid_k > 1 else 0)
          + (2 * tn * 4 if b_p is not None else 0))
    cap = _vmem_capacity_bytes()
    vmem_limit = int(min(int(cap * 0.9), max(32 << 20, ws + (16 << 20))))

    cost = pl.CostEstimate(
        flops=2 * Mp * Np * Kp,
        transcendentals=0,
        bytes_accessed=int(Mp * Kp * cdb * grid_n + Kp * Np * cdb * grid_m
                           + Mp * Np * odb
                           + (Np * 4 if b_p is not None else 0)),
    )

    if grid_k > 1:
        # Real reduction axis: K innermost, "arbitrary"; M/N "parallel".
        if b_p is not None:
            kernel = _mm_bias_acc_kernel
            in_specs = [
                pl.BlockSpec((tm, tk), lambda i, j, k: (i, k)),
                pl.BlockSpec((tk, tn), lambda i, j, k: (k, j)),
                pl.BlockSpec((1, tn), lambda i, j, k: (0, j)),
            ]
            operands = (x_c, wt_p, b_p)
        else:
            kernel = _mm_acc_kernel
            in_specs = [
                pl.BlockSpec((tm, tk), lambda i, j, k: (i, k)),
                pl.BlockSpec((tk, tn), lambda i, j, k: (k, j)),
            ]
            operands = (x_c, wt_p)
        out_spec = pl.BlockSpec((tm, tn), lambda i, j, k: (i, j))
        grid = (grid_m, grid_n, grid_k)
        scratch = [pltpu.VMEM((tm, tn), jnp.float32)]
        dims = ("parallel", "parallel", "arbitrary")
    else:
        # K fits one tile: 2D grid, no scratch accumulator, no init/finalize.
        if b_p is not None:
            kernel = _mm_bias_kernel
            in_specs = [
                pl.BlockSpec((tm, Kp), lambda i, j: (i, 0)),
                pl.BlockSpec((Kp, tn), lambda i, j: (0, j)),
                pl.BlockSpec((1, tn), lambda i, j: (0, j)),
            ]
            operands = (x_c, wt_p, b_p)
        else:
            kernel = _mm_kernel
            in_specs = [
                pl.BlockSpec((tm, Kp), lambda i, j: (i, 0)),
                pl.BlockSpec((Kp, tn), lambda i, j: (0, j)),
            ]
            operands = (x_c, wt_p)
        out_spec = pl.BlockSpec((tm, tn), lambda i, j: (i, j))
        grid = (grid_m, grid_n)
        scratch = []
        dims = ("parallel", "parallel")

    out = pl.pallas_call(
        kernel,
        out_shape=jax.ShapeDtypeStruct((Mp, Np), out_dtype),
        grid_spec=pltpu.PrefetchScalarGridSpec(
            num_scalar_prefetch=0,
            grid=grid,
            in_specs=in_specs,
            out_specs=out_spec,
            scratch_shapes=scratch,
        ),
        compiler_params=pltpu.CompilerParams(
            dimension_semantics=dims,
            vmem_limit_bytes=vmem_limit,
        ),
        cost_estimate=cost,
    )(*operands)

    if (Mp, Np) != (B, N):
        out = out[:B, :N]
    return out


def us_linear_forward(x, weight, bias=None, compute_dtype=jnp.bfloat16,
                      block_m=None, block_n=None, block_k=None):
    """Convenience one-shot forward: y = x @ weight.T + bias.

    For repeated calls (weight-stationary), call us_linear_prepare() once and
    us_linear_apply() per forward instead.
    """
    prepared = us_linear_prepare(weight, bias, compute_dtype, block_n, block_k)
    return us_linear_apply(x, prepared, block_m)


# ----------------------------------------------------------------------------
# Parameter init matching the PyTorch module
# ----------------------------------------------------------------------------

def init_us_linear_params(key, in_features, out_features, dtype=jnp.float32):
    """kaiming_uniform_(a=sqrt(5)) on (out,in) => U(+-1/sqrt(in)); same for bias."""
    kw, kfb, kb = jax.random.split(key, 3)
    bound = 1.0 / math.sqrt(in_features)
    weight = jax.random.uniform(
        kw, (out_features, in_features), dtype, minval=-bound, maxval=bound)
    weight_fb = jax.random.uniform(
        kfb, (out_features, in_features), dtype, minval=-bound, maxval=bound)
    bias = jax.random.uniform(
        kb, (out_features,), dtype, minval=-bound, maxval=bound)
    return weight, weight_fb, bias


if __name__ == "__main__":
    key = jax.random.PRNGKey(0)
    k1, k2, k3, k4, k5, k6, k7 = jax.random.split(key, 7)

    # --- Test 1: small shape consistent with the module, f32 end-to-end. ---
    B, K, N = 8, 32, 64
    x = jax.random.normal(k1, (B, K), jnp.float32)
    w, w_fb, b = init_us_linear_params(k2, K, N)
    # w_fb only matters for backward (sign(weight_fb)); forward ignores it.
    y = jax.block_until_ready(
        us_linear_forward(x, w, b, compute_dtype=jnp.float32))
    y_ref = x @ w.T + b[None, :]
    assert y.shape == (B, N)
    assert jnp.allclose(y, y_ref, atol=1e-5, rtol=1e-5), "small f32 mismatch"

    # --- Test 2: weight-stationary prepared path, bf16 MXU, and explicit
    #     small block overrides to exercise a real (M, N, K) grid. ---
    B2, K2, N2 = 96, 256, 384
    x2 = jax.random.normal(k3, (B2, K2), jnp.float32)
    w2, _, b2 = init_us_linear_params(k4, K2, N2)
    prep = us_linear_prepare(w2, b2, compute_dtype=jnp.bfloat16,
                             block_n=128, block_k=128)
    y2 = jax.block_until_ready(us_linear_apply(x2, prep, block_m=32))
    y2_ref = jnp.dot(x2.astype(jnp.bfloat16), w2.T.astype(jnp.bfloat16),
                     preferred_element_type=jnp.float32) + b2[None, :]
    assert y2.shape == (B2, N2)
    assert jnp.allclose(y2, y2_ref, atol=1e-2, rtol=1e-2), "bf16 tiled mismatch"

    # --- Test 3: bias=None path (no fabricated zero-bias operand). ---
    B3, K3, N3 = 16, 64, 128
    x3 = jax.random.normal(k5, (B3, K3), jnp.float32)
    w3, _, _ = init_us_linear_params(k6, K3, N3)
    y3 = jax.block_until_ready(
        us_linear_forward(x3, w3, None, compute_dtype=jnp.float32))
    assert jnp.allclose(y3, x3 @ w3.T, atol=1e-5, rtol=1e-5), "no-bias mismatch"

    # --- Test 4: single-tile problem gets split along N (megacore path). ---
    B4, K4, N4 = 8, 32, 512
    x4 = jax.random.normal(k7, (B4, K4), jnp.float32)
    w4, _, b4 = init_us_linear_params(jax.random.PRNGKey(1), K4, N4)
    y4 = jax.block_until_ready(
        us_linear_forward(x4, w4, b4, compute_dtype=jnp.float32))
    assert jnp.allclose(y4, x4 @ w4.T + b4[None, :], atol=1e-5, rtol=1e-5), \
        "megacore-split mismatch"

    print("KERNEL_OK")
</pallas_src>

<mosaic_0001>
module attributes {stable_mosaic.version = 11 : i64} {
  func.func @_mm_bias_kernel(%arg0: i32, %arg1: i32, %arg2: memref<8x128xf32, #tpu.memory_space<vmem>>, %arg3: memref<128x128xf32, #tpu.memory_space<vmem>>, %arg4: memref<1x128xf32, #tpu.memory_space<vmem>>, %arg5: memref<8x128xf32, #tpu.memory_space<vmem>>) attributes {dimension_semantics = [#tpu.dimension_semantics<parallel>, #tpu.dimension_semantics<parallel>], iteration_bounds = array<i64: 1, 1>, scalar_prefetch = 0 : i64, scratch_operands = 0 : i64, tpu.core_type = #tpu.core_type<tc>, window_params = [{transform_indices = @transform_0, window_bounds = array<i64: 8, 128>}, {transform_indices = @transform_1, window_bounds = array<i64: 128, 128>}, {transform_indices = @transform_2, window_bounds = array<i64: 1, 128>}, {transform_indices = @transform_3, window_bounds = array<i64: 8, 128>}]} {
    %c0 = arith.constant 0 : index
    %c0_0 = arith.constant 0 : index
    %0 = vector.load %arg2[%c0, %c0_0] : memref<8x128xf32, #tpu.memory_space<vmem>>, vector<8x128xf32>
    %c0_1 = arith.constant 0 : index
    %c0_2 = arith.constant 0 : index
    %1 = vector.load %arg3[%c0_1, %c0_2] : memref<128x128xf32, #tpu.memory_space<vmem>>, vector<128x128xf32>
    %cst = arith.constant dense<0.000000e+00> : vector<8x128xf32>
    %2 = tpu.matmul %0, %1, %cst {dimension_numbers = #tpu.dot_dimension_numbers<[1], [0], [0], [1], [0, 0, 1, 1], [], []>} : vector<8x128xf32>, vector<128x128xf32>, vector<8x128xf32> -> vector<8x128xf32>
    %c0_3 = arith.constant 0 : index
    %c0_4 = arith.constant 0 : index
    %3 = vector.load %arg4[%c0_3, %c0_4] : memref<1x128xf32, #tpu.memory_space<vmem>>, vector<1x128xf32>
    %4 = vector.broadcast %3 : vector<1x128xf32> to vector<8x128xf32>
    %5 = arith.addf %2, %4 : vector<8x128xf32>
    %c0_5 = arith.constant 0 : index
    %c0_6 = arith.constant 0 : index
    %6 = vector.load %arg5[%c0_5, %c0_6] : memref<8x128xf32, #tpu.memory_space<vmem>>, vector<8x128xf32>
    tpu.vector_store %arg5[%c0_5, %c0_6], %5 {strides = array<i32>} : memref<8x128xf32, #tpu.memory_space<vmem>>, vector<8x128xf32>,
    return
  }
  func.func @transform_0(%arg0: i32, %arg1: i32) -> (i32, i32) {
    %c0_i32 = arith.constant 0 : i32
    %c0_i32_0 = arith.constant 0 : i32
    return %arg0, %c0_i32 : i32, i32
  }
  func.func @transform_1(%arg0: i32, %arg1: i32) -> (i32, i32) {
    %c0_i32 = arith.constant 0 : i32
    %c0_i32_0 = arith.constant 0 : i32
    return %c0_i32, %arg1 : i32, i32
  }
  func.func @transform_2(%arg0: i32, %arg1: i32) -> (i32, i32) {
    %c0_i32 = arith.constant 0 : i32
    %c0_i32_0 = arith.constant 0 : i32
    return %c0_i32, %arg1 : i32, i32
  }
  func.func @transform_3(%arg0: i32, %arg1: i32) -> (i32, i32) {
    %c0_i32 = arith.constant 0 : i32
    return %arg0, %arg1 : i32, i32
  }
}

</mosaic_0001>

<llo_original>
// kernel: tpu_custom_call.1
$region0: #{tpu_custom_call.1}
  #allocation0 [shape = 'u32[]', space=smem, size = 0x4, offset = 0x4, fixed_abs, tag = 'smem constant byte address 0x4 - core index']
  #allocation1 [shape = 'u32[144,128]{1,0:T(1,128)}', space=vmem, size = 0x12000, scoped, tag = 'internal scratch']
  %s0 = inlined_call_operand.hbm [shape: f32[8,128], index: 0, kind: input, shape index: {}]
  %s1 = inlined_call_operand.hbm [shape: f32[128,128], index: 1, kind: input, shape index: {}]
  %s2 = inlined_call_operand.vmem [shape: f32[1,128], index: 2, kind: input, shape index: {}]
  %s3 = inlined_call_operand.hbm [shape: f32[8,128], index: 3, kind: output, shape index: {}]
  %s4 = sld [smem:[#allocation0]]
  $region30: #{tpu_custom_call.1} parent=0
    _
  %s6 = ssub.s32 1, %s4
  %s7 = scalar_select 0, %s6, %s4
  $region1: #{tpu_custom_call.1} parent=0
    #allocation2 [shape = 'u8[4096]{0}', space=vmem, size = 0x1000, scoped, tag = 'input window, operand 0, single buffered']
    #allocation3 [shape = 's32[1]{0}', space=sflag, size = 0x4, scoped, tag = 'scoped memory for tpu_custom_call.1']
    #allocation4 [shape = 's32[1]{0}', space=sflag, size = 0x4, scoped, tag = 'scoped memory for tpu_custom_call.1']
    #allocation5 [shape = 'u8[65536]{0}', space=vmem, size = 0x10000, scoped, tag = 'input window, operand 1, single buffered']
    #allocation6 [shape = 's32[1]{0}', space=sflag, size = 0x4, scoped, tag = 'scoped memory for tpu_custom_call.1']
    #allocation7 [shape = 'u8[4096]{0}', space=vmem, size = 0x1000, scoped, tag = 'output window, operand 0, single buffered']
    %8 = vsyncpa [#allocation3], 0
    %9 = vsyncpa [#allocation6], 0
    %10 = vsyncpa [#allocation4], 0
    // Predicated region
    $region2: #{tpu_custom_call.1} parent=1 // pred_check
      _
    $region3: #{tpu_custom_call.1} parent=1 // pred_check_branch
      %12 = sbr.rel (0) target = $region5
    $region4: #{tpu_custom_call.1} parent=1 // pred_region
      %s14 = ssub.s32 128, 128
      %15 = vsyncadd [#allocation3], %s14
      %s17 = sshll.u32 [#allocation2], 4
      %s18 = int_to_ptr.vmem [resolvable:$true] %s17
      %20 = dma.hbm_to_vmem [thread:$0]  %s0, 128, %s18, [#allocation3]
    $region5: #{tpu_custom_call.1} parent=1 // pred_fallthru
      _
    // Predicated region
    $region6: #{tpu_custom_call.1} parent=1 // pred_check
      _
    $region7: #{tpu_custom_call.1} parent=1 // pred_check_branch
      %22 = sbr.rel (0) target = $region9
    $region8: #{tpu_custom_call.1} parent=1 // pred_region
      %s24 = ssub.s32 2048, 2048
      %25 = vsyncadd [#allocation6], %s24
      %s26 = sshll.u32 [#allocation5], 4
      %s27 = int_to_ptr.vmem [resolvable:$true] %s26
      %32 = dma.hbm_to_vmem [thread:$0]  %s1, 2048, %s27, [#allocation6], 128, 128, 8
    $region9: #{tpu_custom_call.1} parent=1 // pred_fallthru
      _
    // Predicated region
    $region10: #{tpu_custom_call.1} parent=1 // pred_check
      _
    $region11: #{tpu_custom_call.1} parent=1 // pred_check_branch
      %34 = sbr.rel (0) target = $region13
    $region12: #{tpu_custom_call.1} parent=1 // pred_region
      _
    $region13: #{tpu_custom_call.1} parent=1 // pred_fallthru
      _
    // Predicated region
    $region14: #{tpu_custom_call.1} parent=1 // pred_check
      _
    $region15: #{tpu_custom_call.1} parent=1 // pred_check_branch
      %36 = sbr.rel (0) target = $region17
    $region16: #{tpu_custom_call.1} parent=1 // pred_region
      %37 = dma.done [#allocation3], 128
    $region17: #{tpu_custom_call.1} parent=1 // pred_fallthru
      _
    // Predicated region
    $region18: #{tpu_custom_call.1} parent=1 // pred_check
      _
    $region19: #{tpu_custom_call.1} parent=1 // pred_check_branch
      %39 = sbr.rel (0) target = $region21
    $region20: #{tpu_custom_call.1} parent=1 // pred_region
      %40 = dma.done [#allocation6], 2048
    $region21: #{tpu_custom_call.1} parent=1 // pred_fallthru
      _
    %v41 = vld [vmem:[#allocation2] sm:$0xff]
    %v42 = vld [vmem:[#allocation5] sm:$0xff]
    %v43 = vld [vmem:[#allocation5 + $0x8] sm:$0xff]
    %v44 = vld [vmem:[#allocation5 + $0x10] sm:$0xff]
    %v45 = vld [vmem:[#allocation5 + $0x18] sm:$0xff]
    %v46 = vld [vmem:[#allocation5 + $0x20] sm:$0xff]
    %v47 = vld [vmem:[#allocation5 + $0x28] sm:$0xff]
    %v48 = vld [vmem:[#allocation5 + $0x30] sm:$0xff]
    %v49 = vld [vmem:[#allocation5 + $0x38] sm:$0xff]
    %v50 = vld [vmem:[#allocation5 + $0x40] sm:$0xff]
    %v51 = vld [vmem:[#allocation5 + $0x48] sm:$0xff]
    %v52 = vld [vmem:[#allocation5 + $0x50] sm:$0xff]
    %v53 = vld [vmem:[#allocation5 + $0x58] sm:$0xff]
    %v54 = vld [vmem:[#allocation5 + $0x60] sm:$0xff]
    %v55 = vld [vmem:[#allocation5 + $0x68] sm:$0xff]
    %v56 = vld [vmem:[#allocation5 + $0x70] sm:$0xff]
    %v57 = vld [vmem:[#allocation5 + $0x78] sm:$0xff]
    %v58 = vld [vmem:[%s2] sm:$0x1]
    %v60 = vlaneseq
    %v61 = vshrl.u32 %v60, 7
    %v62 = vsub.s32 0, %v61
    %v63 = vrot.slane %v58, %v62
    %65 = vmatprep.subr.mxu0 0.0
    %66 = vmatpush1.msra.mxu0 %v57
    %67 = vmatprep.subr.mxu0 0.0
    %68 = vmatpush1.msra.mxu0 %v56
    %69 = vmatprep.subr.mxu0 0.0
    %70 = vmatpush1.msra.mxu0 %v55
    %71 = vmatprep.subr.mxu0 0.0
    %72 = vmatpush1.msra.mxu0 %v54
    %73 = vmatprep.subr.mxu0 0.0
    %74 = vmatpush1.msra.mxu0 %v53
    %75 = vmatprep.subr.mxu0 0.0
    %76 = vmatpush1.msra.mxu0 %v52
    %77 = vmatprep.subr.mxu0 0.0
    %78 = vmatpush1.msra.mxu0 %v51
    %79 = vmatprep.subr.mxu0 0.0
    %80 = vmatpush1.msra.mxu0 %v50
    %81 = vmatprep.subr.mxu0 0.0
    %82 = vmatpush1.msra.mxu0 %v49
    %83 = vmatprep.subr.mxu0 0.0
    %84 = vmatpush1.msra.mxu0 %v48
    %85 = vmatprep.subr.mxu0 0.0
    %86 = vmatpush1.msra.mxu0 %v47
    %87 = vmatprep.subr.mxu0 0.0
    %88 = vmatpush1.msra.mxu0 %v46
    %89 = vmatprep.subr.mxu0 0.0
    %90 = vmatpush1.msra.mxu0 %v45
    %91 = vmatprep.subr.mxu0 0.0
    %92 = vmatpush1.msra.mxu0 %v44
    %93 = vmatprep.subr.mxu0 0.0
    %94 = vmatpush1.msra.mxu0 %v43
    %95 = vmatprep.subr.mxu0 0.0
    %96 = vmatpush1.msra.mxu0 %v42
    %97 = vmatprep.subr.mxu0 0.0
    %98 = vmatpush2.msra.mxu0 0.0
    %99 = vmatprep.subr.mxu0 0.0
    %100 = vmatpush2.msra.mxu0 0.0
    %101 = vmatprep.subr.mxu0 0.0
    %102 = vmatpush2.msra.mxu0 0.0
    %103 = vmatprep.subr.mxu0 0.0
    %104 = vmatpush2.msra.mxu0 0.0
    %105 = vmatprep.subr.mxu0 0.0
    %106 = vmatpush2.msra.mxu0 0.0
    %107 = vmatprep.subr.mxu0 0.0
    %108 = vmatpush2.msra.mxu0 0.0
    %109 = vmatprep.subr.mxu0 0.0
    %110 = vmatpush2.msra.mxu0 0.0
    %111 = vmatprep.subr.mxu0 0.0
    %112 = vmatpush2.msra.mxu0 0.0
    %113 = vmatprep.subr.mxu0 0.0
    %114 = vmatpush2.msra.mxu0 0.0
    %115 = vmatprep.subr.mxu0 0.0
    %116 = vmatpush2.msra.mxu0 0.0
    %117 = vmatprep.subr.mxu0 0.0
    %118 = vmatpush2.msra.mxu0 0.0
    %119 = vmatprep.subr.mxu0 0.0
    %120 = vmatpush2.msra.mxu0 0.0
    %121 = vmatprep.subr.mxu0 0.0
    %122 = vmatpush2.msra.mxu0 0.0
    %123 = vmatprep.subr.mxu0 0.0
    %124 = vmatpush2.msra.mxu0 0.0
    %125 = vmatprep.subr.mxu0 0.0
    %126 = vmatpush2.msra.mxu0 0.0
    %127 = vmatprep.subr.mxu0 0.0
    %128 = vmatpush2.msra.mxu0 0.0
    %129 = vmatprep.mubr.f32.mxu0 0.0
    %130 = vmatmul.mubr.f32.gmra.mxu0 %v41
    %v131 = vpop.f32.mrf.mxu0
    %v132 = vadd.f32 %v63, %v131
    %v133 = vpop.f32.mrf.mxu0
    %134 = vdwg.mxu0
    %135 = vst [vmem:[#allocation7] sm:$0xff] %v132
    // Predicated region
    $region22: #{tpu_custom_call.1} parent=1 // pred_check
      _
    $region23: #{tpu_custom_call.1} parent=1 // pred_check_branch
      %137 = sbr.rel (0) target = $region25
    $region24: #{tpu_custom_call.1} parent=1 // pred_region
      %s139 = ssub.s32 128, 128
      %140 = vsyncadd [#allocation4], %s139
      %s142 = sshll.u32 [#allocation7], 4
      %s143 = int_to_ptr.vmem [resolvable:$true] %s142
      %145 = dma.vmem_to_hbm [thread:$0]  %s143, 128, %s3, [#allocation4]
    $region25: #{tpu_custom_call.1} parent=1 // pred_fallthru
      _
    // Predicated region
    $region26: #{tpu_custom_call.1} parent=1 // pred_check
      _
    $region27: #{tpu_custom_call.1} parent=1 // pred_check_branch
      %147 = sbr.rel (0) target = $region29
    $region28: #{tpu_custom_call.1} parent=1 // pred_region
      %148 = dma.done [#allocation4], 128
    $region29: #{tpu_custom_call.1} parent=1 // pred_fallthru
      _
    %149 = vsyncpa [#allocation3], 1
    %150 = vsyncpa [#allocation6], 1
    %151 = vsyncpa [#allocation4], 1

</llo_original>
